<compile_context>
chip_gen: v6e
topology: v6e:2x2x1
jax: 0.10.0
libtpu: 0.0.40
codegen_flags: <defaults>
</compile_context>

<pallas_src>
import math

import jax
import jax.numpy as jnp
from jax import lax
from jax.experimental import pallas as pl
from jax.experimental.pallas import tpu as pltpu


def _round_up(x, m):
    return (x + m - 1) // m * m


def actor_kernel(x_ref, u_ref, w1_ref, b1_ref, w2_ref, b2_ref,
                 w3_ref, b3_ref, out_ref):
    eps_ln = 1e-5
    eps_g = 1e-20

    # Feature-major: x is (in_dim, tile_b), batch on the 128-lane axis.
    x = x_ref[...].astype(jnp.bfloat16)

    # ---- linear1 + LayerNorm (gamma=1, beta=0) + ReLU ----
    h = jnp.dot(w1_ref[...], x, preferred_element_type=jnp.float32) + b1_ref[...]
    mu = jnp.mean(h, axis=0, keepdims=True)
    d = h - mu
    var = jnp.mean(d * d, axis=0, keepdims=True)
    h = d * lax.rsqrt(var + eps_ln)
    h = jnp.maximum(h, 0.0)

    # ---- linear2 + LayerNorm2 + ReLU ----
    h = jnp.dot(w2_ref[...], h.astype(jnp.bfloat16),
                preferred_element_type=jnp.float32) + b2_ref[...]
    mu = jnp.mean(h, axis=0, keepdims=True)
    d = h - mu
    var = jnp.mean(d * d, axis=0, keepdims=True)
    h = d * lax.rsqrt(var + eps_ln)
    h = jnp.maximum(h, 0.0)

    # ---- acts (logits), shape (action, tile_b) ----
    logits = jnp.dot(w3_ref[...], h.astype(jnp.bfloat16),
                     preferred_element_type=jnp.float32) + b3_ref[...]

    # ---- soft Gumbel-Softmax sample, temperature=1.0, over the action dim ----
    # TODO(synk): hard=True / epsilon-greedy straight-through branch of
    # GumbelSoftmax is not implemented (module forward defaults to hard=False).
    u = u_ref[...]
    g = -jnp.log(-jnp.log(u + eps_g) + eps_g)
    z = logits + g
    z = z - jnp.max(z, axis=0, keepdims=True)
    e = jnp.exp(z)
    out_ref[...] = (e / jnp.sum(e, axis=0, keepdims=True)).astype(out_ref.dtype)


def actor_forward(x, params, noise_key, *, tile_b=4096):
    """Fused Actor forward.  x: (batch, input) f32 -> (batch, action) f32."""
    w1, b1, w2, b2, w3, b3 = params
    batch, in_dim = x.shape
    hidden = w1.shape[0]
    action = w3.shape[0]

    # Batch lives on the lane axis -> tile must be a multiple of 128.
    lane = 128
    padded128 = _round_up(batch, lane)
    tile = _round_up(min(tile_b, padded128), lane)
    # Keep >= 2 grid steps when there is enough work so the "parallel" batch
    # axis can be split across v7x's two TensorCores.
    if padded128 >= 2 * lane and tile > padded128 // 2:
        tile = _round_up(padded128 // 2, lane)
    padded = _round_up(batch, tile)
    num_tiles = padded // tile

    xt = x.T                                            # (in_dim, batch)
    if padded != batch:
        xt = jnp.pad(xt, ((0, 0), (0, padded - batch)))

    # Uniform [0,1) noise for the Gumbel sample (matches torch.rand in the
    # reference GumbelSoftmax), generated lane-dense: (action, padded_batch).
    u = jax.random.uniform(noise_key, (action, padded), dtype=jnp.float32)

    resident = lambda i: (0, 0)   # weights / biases stay VMEM-resident
    batched = lambda i: (0, i)    # tiled along the batch (lane) axis

    out = pl.pallas_call(
        actor_kernel,
        out_shape=jax.ShapeDtypeStruct((action, padded), jnp.float32),
        grid=(num_tiles,),
        in_specs=[
            pl.BlockSpec((in_dim, tile), batched),
            pl.BlockSpec((action, tile), batched),
            pl.BlockSpec((hidden, in_dim), resident),
            pl.BlockSpec((hidden, 1), resident),
            pl.BlockSpec((hidden, hidden), resident),
            pl.BlockSpec((hidden, 1), resident),
            pl.BlockSpec((action, hidden), resident),
            pl.BlockSpec((action, 1), resident),
        ],
        out_specs=pl.BlockSpec((action, tile), batched),
        compiler_params=pltpu.CompilerParams(
            dimension_semantics=("parallel",),   # megacore split on v7x
        ),
    )(xt, u, w1, b1, w2, b2, w3, b3)

    return out[:, :batch].T


def init_actor_params(key, input_size, hidden_size, action_space):
    """Deterministic init mirroring the PyTorch module's custom init.
    Weights kept in the natural (out_features, in_features) layout (feature-
    major kernel computes W @ X) and stored bf16; biases f32, shape (out, 1)."""
    k1, k2, k3, k4, k5, k6 = jax.random.split(key, 6)
    s = 1.0 / math.sqrt(input_size)

    # linear1 / linear2: 0.006*2/sqrt(inputSize)*rand - 1/sqrt(inputSize)
    # (the PyTorch module reuses inputSize in linear2's scale as well).
    w1 = 0.006 * 2.0 * s * jax.random.uniform(k1, (hidden_size, input_size)) - s
    b1 = 0.006 * 2.0 * s * jax.random.uniform(k2, (hidden_size,)) - s
    w2 = 0.006 * 2.0 * s * jax.random.uniform(k3, (hidden_size, hidden_size)) - s
    b2 = 0.006 * 2.0 * s * jax.random.uniform(k4, (hidden_size,)) - s
    # acts: 0.0006*rand - 0.0003
    w3 = 0.0006 * jax.random.uniform(k5, (action_space, hidden_size)) - 0.0003
    b3 = 0.0006 * jax.random.uniform(k6, (action_space,)) - 0.0003

    return (
        w1.astype(jnp.bfloat16), b1.reshape(-1, 1).astype(jnp.float32),
        w2.astype(jnp.bfloat16), b2.reshape(-1, 1).astype(jnp.float32),
        w3.astype(jnp.bfloat16), b3.reshape(-1, 1).astype(jnp.float32),
    )


if __name__ == "__main__":
    # Small shapes consistent with the module: (batch, inputSize) -> (batch, actionSpace)
    batch, input_size, hidden_size, action_space = 8, 32, 32, 16

    key = jax.random.PRNGKey(0)
    k_param, k_x, k_noise = jax.random.split(key, 3)

    params = init_actor_params(k_param, input_size, hidden_size, action_space)
    x = jax.random.normal(k_x, (batch, input_size), dtype=jnp.float32)

    out = actor_forward(x, params, k_noise)
    out = jax.block_until_ready(out)

    # sanity: valid soft Gumbel-Softmax output (non-negative, rows sum to 1)
    assert out.shape == (batch, action_space)
    assert bool(jnp.all(jnp.isfinite(out)))
    assert bool(jnp.all(out >= 0.0))
    assert bool(jnp.allclose(jnp.sum(out, axis=-1), 1.0, atol=1e-4))

    print("KERNEL_OK")
</pallas_src>

<mosaic_0001>
module attributes {stable_mosaic.version = 11 : i64} {
  func.func @actor_kernel(%arg0: i32, %arg1: memref<32x128xf32, #tpu.memory_space<vmem>>, %arg2: memref<16x128xf32, #tpu.memory_space<vmem>>, %arg3: memref<32x32xbf16, #tpu.memory_space<vmem>>, %arg4: memref<32x1xf32, #tpu.memory_space<vmem>>, %arg5: memref<32x32xbf16, #tpu.memory_space<vmem>>, %arg6: memref<32x1xf32, #tpu.memory_space<vmem>>, %arg7: memref<16x32xbf16, #tpu.memory_space<vmem>>, %arg8: memref<16x1xf32, #tpu.memory_space<vmem>>, %arg9: memref<16x128xf32, #tpu.memory_space<vmem>>) attributes {dimension_semantics = [#tpu.dimension_semantics<parallel>], iteration_bounds = array<i64: 1>, scalar_prefetch = 0 : i64, scratch_operands = 0 : i64, tpu.core_type = #tpu.core_type<tc>, window_params = [{transform_indices = @transform_0, window_bounds = array<i64: 32, 128>}, {transform_indices = @transform_1, window_bounds = array<i64: 16, 128>}, {pipeline_mode = #tpu.pipeline_mode<synchronous>, transform_indices = @transform_2, window_bounds = array<i64: 32, 32>}, {pipeline_mode = #tpu.pipeline_mode<synchronous>, transform_indices = @transform_3, window_bounds = array<i64: 32, 1>}, {pipeline_mode = #tpu.pipeline_mode<synchronous>, transform_indices = @transform_4, window_bounds = array<i64: 32, 32>}, {pipeline_mode = #tpu.pipeline_mode<synchronous>, transform_indices = @transform_5, window_bounds = array<i64: 32, 1>}, {pipeline_mode = #tpu.pipeline_mode<synchronous>, transform_indices = @transform_6, window_bounds = array<i64: 16, 32>}, {pipeline_mode = #tpu.pipeline_mode<synchronous>, transform_indices = @transform_7, window_bounds = array<i64: 16, 1>}, {transform_indices = @transform_8, window_bounds = array<i64: 16, 128>}]} {
    %c0 = arith.constant 0 : index
    %c0_0 = arith.constant 0 : index
    %0 = vector.load %arg1[%c0, %c0_0] : memref<32x128xf32, #tpu.memory_space<vmem>>, vector<32x128xf32>
    %1 = arith.truncf %0 : vector<32x128xf32> to vector<32x128xbf16>
    %c0_1 = arith.constant 0 : index
    %c0_2 = arith.constant 0 : index
    %2 = vector.load %arg3[%c0_1, %c0_2] : memref<32x32xbf16, #tpu.memory_space<vmem>>, vector<32x32xbf16>
    %cst = arith.constant dense<0.000000e+00> : vector<32x128xf32>
    %3 = tpu.matmul %2, %1, %cst {dimension_numbers = #tpu.dot_dimension_numbers<[1], [0], [0], [1], [0, 0, 1, 1], [], []>} : vector<32x32xbf16>, vector<32x128xbf16>, vector<32x128xf32> -> vector<32x128xf32>
    %c0_3 = arith.constant 0 : index
    %c0_4 = arith.constant 0 : index
    %4 = vector.load %arg4[%c0_3, %c0_4] : memref<32x1xf32, #tpu.memory_space<vmem>>, vector<32x1xf32>
    %5 = vector.broadcast %4 : vector<32x1xf32> to vector<32x128xf32>
    %6 = arith.addf %3, %5 : vector<32x128xf32>
    %cst_5 = arith.constant dense<0.000000e+00> : vector<128xf32>
    %7 = vector.multi_reduction <add>, %6, %cst_5 [0] : vector<32x128xf32> to vector<128xf32>
    %8 = vector.shape_cast %7 : vector<128xf32> to vector<1x128xf32>
    %cst_6 = arith.constant 3.200000e+01 : f32
    %9 = vector.broadcast %cst_6 : f32 to vector<1x128xf32>
    %10 = arith.divf %8, %9 : vector<1x128xf32>
    %11 = vector.broadcast %10 : vector<1x128xf32> to vector<32x128xf32>
    %12 = arith.subf %6, %11 : vector<32x128xf32>
    %13 = arith.mulf %12, %12 : vector<32x128xf32>
    %cst_7 = arith.constant dense<0.000000e+00> : vector<128xf32>
    %14 = vector.multi_reduction <add>, %13, %cst_7 [0] : vector<32x128xf32> to vector<128xf32>
    %15 = vector.shape_cast %14 : vector<128xf32> to vector<1x128xf32>
    %cst_8 = arith.constant 3.200000e+01 : f32
    %16 = vector.broadcast %cst_8 : f32 to vector<1x128xf32>
    %17 = arith.divf %15, %16 : vector<1x128xf32>
    %cst_9 = arith.constant 9.99999974E-6 : f32
    %18 = vector.broadcast %cst_9 : f32 to vector<1x128xf32>
    %19 = arith.addf %17, %18 : vector<1x128xf32>
    %20 = math.rsqrt %19 : vector<1x128xf32>
    %21 = vector.broadcast %20 : vector<1x128xf32> to vector<32x128xf32>
    %22 = arith.mulf %12, %21 : vector<32x128xf32>
    %cst_10 = arith.constant 0.000000e+00 : f32
    %23 = vector.broadcast %cst_10 : f32 to vector<32x128xf32>
    %24 = arith.maximumf %22, %23 : vector<32x128xf32>
    %c0_11 = arith.constant 0 : index
    %c0_12 = arith.constant 0 : index
    %25 = vector.load %arg5[%c0_11, %c0_12] : memref<32x32xbf16, #tpu.memory_space<vmem>>, vector<32x32xbf16>
    %26 = arith.truncf %24 : vector<32x128xf32> to vector<32x128xbf16>
    %cst_13 = arith.constant dense<0.000000e+00> : vector<32x128xf32>
    %27 = tpu.matmul %25, %26, %cst_13 {dimension_numbers = #tpu.dot_dimension_numbers<[1], [0], [0], [1], [0, 0, 1, 1], [], []>} : vector<32x32xbf16>, vector<32x128xbf16>, vector<32x128xf32> -> vector<32x128xf32>
    %c0_14 = arith.constant 0 : index
    %c0_15 = arith.constant 0 : index
    %28 = vector.load %arg6[%c0_14, %c0_15] : memref<32x1xf32, #tpu.memory_space<vmem>>, vector<32x1xf32>
    %29 = vector.broadcast %28 : vector<32x1xf32> to vector<32x128xf32>
    %30 = arith.addf %27, %29 : vector<32x128xf32>
    %cst_16 = arith.constant dense<0.000000e+00> : vector<128xf32>
    %31 = vector.multi_reduction <add>, %30, %cst_16 [0] : vector<32x128xf32> to vector<128xf32>
    %32 = vector.shape_cast %31 : vector<128xf32> to vector<1x128xf32>
    %cst_17 = arith.constant 3.200000e+01 : f32
    %33 = vector.broadcast %cst_17 : f32 to vector<1x128xf32>
    %34 = arith.divf %32, %33 : vector<1x128xf32>
    %35 = vector.broadcast %34 : vector<1x128xf32> to vector<32x128xf32>
    %36 = arith.subf %30, %35 : vector<32x128xf32>
    %37 = arith.mulf %36, %36 : vector<32x128xf32>
    %cst_18 = arith.constant dense<0.000000e+00> : vector<128xf32>
    %38 = vector.multi_reduction <add>, %37, %cst_18 [0] : vector<32x128xf32> to vector<128xf32>
    %39 = vector.shape_cast %38 : vector<128xf32> to vector<1x128xf32>
    %cst_19 = arith.constant 3.200000e+01 : f32
    %40 = vector.broadcast %cst_19 : f32 to vector<1x128xf32>
    %41 = arith.divf %39, %40 : vector<1x128xf32>
    %cst_20 = arith.constant 9.99999974E-6 : f32
    %42 = vector.broadcast %cst_20 : f32 to vector<1x128xf32>
    %43 = arith.addf %41, %42 : vector<1x128xf32>
    %44 = math.rsqrt %43 : vector<1x128xf32>
    %45 = vector.broadcast %44 : vector<1x128xf32> to vector<32x128xf32>
    %46 = arith.mulf %36, %45 : vector<32x128xf32>
    %cst_21 = arith.constant 0.000000e+00 : f32
    %47 = vector.broadcast %cst_21 : f32 to vector<32x128xf32>
    %48 = arith.maximumf %46, %47 : vector<32x128xf32>
    %c0_22 = arith.constant 0 : index
    %c0_23 = arith.constant 0 : index
    %49 = vector.load %arg7[%c0_22, %c0_23] : memref<16x32xbf16, #tpu.memory_space<vmem>>, vector<16x32xbf16>
    %50 = arith.truncf %48 : vector<32x128xf32> to vector<32x128xbf16>
    %cst_24 = arith.constant dense<0.000000e+00> : vector<16x128xf32>
    %51 = tpu.matmul %49, %50, %cst_24 {dimension_numbers = #tpu.dot_dimension_numbers<[1], [0], [0], [1], [0, 0, 1, 1], [], []>} : vector<16x32xbf16>, vector<32x128xbf16>, vector<16x128xf32> -> vector<16x128xf32>
    %c0_25 = arith.constant 0 : index
    %c0_26 = arith.constant 0 : index
    %52 = vector.load %arg8[%c0_25, %c0_26] : memref<16x1xf32, #tpu.memory_space<vmem>>, vector<16x1xf32>
    %53 = vector.broadcast %52 : vector<16x1xf32> to vector<16x128xf32>
    %54 = arith.addf %51, %53 : vector<16x128xf32>
    %c0_27 = arith.constant 0 : index
    %c0_28 = arith.constant 0 : index
    %55 = vector.load %arg2[%c0_27, %c0_28] : memref<16x128xf32, #tpu.memory_space<vmem>>, vector<16x128xf32>
    %cst_29 = arith.constant 9.99999968E-21 : f32
    %56 = vector.broadcast %cst_29 : f32 to vector<16x128xf32>
    %57 = arith.addf %55, %56 : vector<16x128xf32>
    %58 = math.log %57 : vector<16x128xf32>
    %cst_30 = arith.constant 0.000000e+00 : f32
    %59 = vector.broadcast %cst_30 : f32 to vector<16x128xf32>
    %60 = arith.subf %59, %58 : vector<16x128xf32>
    %cst_31 = arith.constant 9.99999968E-21 : f32
    %61 = vector.broadcast %cst_31 : f32 to vector<16x128xf32>
    %62 = arith.addf %60, %61 : vector<16x128xf32>
    %63 = math.log %62 : vector<16x128xf32>
    %cst_32 = arith.constant 0.000000e+00 : f32
    %64 = vector.broadcast %cst_32 : f32 to vector<16x128xf32>
    %65 = arith.subf %64, %63 : vector<16x128xf32>
    %66 = arith.addf %54, %65 : vector<16x128xf32>
    %cst_33 = arith.constant dense<0xFF800000> : vector<128xf32>
    %67 = vector.multi_reduction <maximumf>, %66, %cst_33 [0] : vector<16x128xf32> to vector<128xf32>
    %68 = vector.shape_cast %67 : vector<128xf32> to vector<1x128xf32>
    %69 = vector.broadcast %68 : vector<1x128xf32> to vector<16x128xf32>
    %70 = arith.subf %66, %69 : vector<16x128xf32>
    %71 = math.exp %70 : vector<16x128xf32>
    %cst_34 = arith.constant dense<0.000000e+00> : vector<128xf32>
    %72 = vector.multi_reduction <add>, %71, %cst_34 [0] : vector<16x128xf32> to vector<128xf32>
    %73 = vector.shape_cast %72 : vector<128xf32> to vector<1x128xf32>
    %74 = vector.broadcast %73 : vector<1x128xf32> to vector<16x128xf32>
    %75 = arith.divf %71, %74 : vector<16x128xf32>
    %c0_35 = arith.constant 0 : index
    %c0_36 = arith.constant 0 : index
    %76 = vector.load %arg9[%c0_35, %c0_36] : memref<16x128xf32, #tpu.memory_space<vmem>>, vector<16x128xf32>
    tpu.vector_store %arg9[%c0_35, %c0_36], %75 {strides = array<i32>} : memref<16x128xf32, #tpu.memory_space<vmem>>, vector<16x128xf32>,
    return
  }
  func.func @transform_0(%arg0: i32) -> (i32, i32) {
    %c0_i32 = arith.constant 0 : i32
    %c0_i32_0 = arith.constant 0 : i32
    return %c0_i32, %arg0 : i32, i32
  }
  func.func @transform_1(%arg0: i32) -> (i32, i32) {
    %c0_i32 = arith.constant 0 : i32
    %c0_i32_0 = arith.constant 0 : i32
    return %c0_i32, %arg0 : i32, i32
  }
  func.func @transform_2(%arg0: i32) -> (i32, i32) {
    %c0_i32 = arith.constant 0 : i32
    %c0_i32_0 = arith.constant 0 : i32
    %c0_i32_1 = arith.constant 0 : i32
    return %c0_i32, %c0_i32_0 : i32, i32
  }
  func.func @transform_3(%arg0: i32) -> (i32, i32) {
    %c0_i32 = arith.constant 0 : i32
    %c0_i32_0 = arith.constant 0 : i32
    %c0_i32_1 = arith.constant 0 : i32
    return %c0_i32, %c0_i32_0 : i32, i32
  }
  func.func @transform_4(%arg0: i32) -> (i32, i32) {
    %c0_i32 = arith.constant 0 : i32
    %c0_i32_0 = arith.constant 0 : i32
    %c0_i32_1 = arith.constant 0 : i32
    return %c0_i32, %c0_i32_0 : i32, i32
  }
  func.func @transform_5(%arg0: i32) -> (i32, i32) {
    %c0_i32 = arith.constant 0 : i32
    %c0_i32_0 = arith.constant 0 : i32
    %c0_i32_1 = arith.constant 0 : i32
    return %c0_i32, %c0_i32_0 : i32, i32
  }
  func.func @transform_6(%arg0: i32) -> (i32, i32) {
    %c0_i32 = arith.constant 0 : i32
    %c0_i32_0 = arith.constant 0 : i32
    %c0_i32_1 = arith.constant 0 : i32
    return %c0_i32, %c0_i32_0 : i32, i32
  }
  func.func @transform_7(%arg0: i32) -> (i32, i32) {
    %c0_i32 = arith.constant 0 : i32
    %c0_i32_0 = arith.constant 0 : i32
    %c0_i32_1 = arith.constant 0 : i32
    return %c0_i32, %c0_i32_0 : i32, i32
  }
  func.func @transform_8(%arg0: i32) -> (i32, i32) {
    %c0_i32 = arith.constant 0 : i32
    %c0_i32_0 = arith.constant 0 : i32
    return %c0_i32, %arg0 : i32, i32
  }
}

</mosaic_0001>

<llo_original>
// kernel: tpu_custom_call.1
$region0: #{tpu_custom_call.1}
  #allocation0 [shape = 'u32[]', space=smem, size = 0x4, offset = 0x4, fixed_abs, tag = 'smem constant byte address 0x4 - core index']
  #allocation1 [shape = 'u32[144,128]{1,0:T(1,128)}', space=vmem, size = 0x12000, scoped, tag = 'internal scratch']
  %s0 = inlined_call_operand.vmem [shape: f32[32,128], index: 0, kind: input, shape index: {}]
  %s1 = inlined_call_operand.vmem [shape: f32[16,128], index: 1, kind: input, shape index: {}]
  %s2 = inlined_call_operand.vmem [shape: bf16[32,32], index: 2, kind: input, shape index: {}]
  %s3 = inlined_call_operand.vmem [shape: f32[32,1], index: 3, kind: input, shape index: {}]
  %s4 = inlined_call_operand.vmem [shape: bf16[32,32], index: 4, kind: input, shape index: {}]
  %s5 = inlined_call_operand.vmem [shape: f32[32,1], index: 5, kind: input, shape index: {}]
  %s6 = inlined_call_operand.vmem [shape: bf16[16,32], index: 6, kind: input, shape index: {}]
  %s7 = inlined_call_operand.vmem [shape: f32[16,1], index: 7, kind: input, shape index: {}]
  %s8 = inlined_call_operand.hbm [shape: f32[16,128], index: 8, kind: output, shape index: {}]
  %s9 = sld [smem:[#allocation0]]
  $region42: #{tpu_custom_call.1} parent=0
    _
  %s11 = ssub.s32 1, %s9
  %s12 = scalar_select 0, %s11, %s9
  $region1: #{tpu_custom_call.1} parent=0
    #allocation2 [shape = 'u8[8192]{0}', space=vmem, size = 0x2000, scoped, tag = 'output window, operand 0, single buffered']
    #allocation3 [shape = 's32[1]{0}', space=sflag, size = 0x4, scoped, tag = 'scoped memory for tpu_custom_call.1']
    %13 = vsyncpa [#allocation3], 0
    // Predicated region
    $region2: #{tpu_custom_call.1} parent=1 // pred_check
      _
    $region3: #{tpu_custom_call.1} parent=1 // pred_check_branch
      %15 = sbr.rel (0) target = $region5
    $region4: #{tpu_custom_call.1} parent=1 // pred_region
      _
    $region5: #{tpu_custom_call.1} parent=1 // pred_fallthru
      _
    // Predicated region
    $region6: #{tpu_custom_call.1} parent=1 // pred_check
      _
    $region7: #{tpu_custom_call.1} parent=1 // pred_check_branch
      %17 = sbr.rel (0) target = $region9
    $region8: #{tpu_custom_call.1} parent=1 // pred_region
      _
    $region9: #{tpu_custom_call.1} parent=1 // pred_fallthru
      _
    // Predicated region
    $region10: #{tpu_custom_call.1} parent=1 // pred_check
      _
    $region11: #{tpu_custom_call.1} parent=1 // pred_check_branch
      %19 = sbr.rel (0) target = $region13
    $region12: #{tpu_custom_call.1} parent=1 // pred_region
      _
    $region13: #{tpu_custom_call.1} parent=1 // pred_fallthru
      _
    // Predicated region
    $region14: #{tpu_custom_call.1} parent=1 // pred_check
      _
    $region15: #{tpu_custom_call.1} parent=1 // pred_check_branch
      %21 = sbr.rel (0) target = $region17
    $region16: #{tpu_custom_call.1} parent=1 // pred_region
      _
    $region17: #{tpu_custom_call.1} parent=1 // pred_fallthru
      _
    // Predicated region
    $region18: #{tpu_custom_call.1} parent=1 // pred_check
      _
    $region19: #{tpu_custom_call.1} parent=1 // pred_check_branch
      %23 = sbr.rel (0) target = $region21
    $region20: #{tpu_custom_call.1} parent=1 // pred_region
      _
    $region21: #{tpu_custom_call.1} parent=1 // pred_fallthru
      _
    // Predicated region
    $region22: #{tpu_custom_call.1} parent=1 // pred_check
      _
    $region23: #{tpu_custom_call.1} parent=1 // pred_check_branch
      %25 = sbr.rel (0) target = $region25
    $region24: #{tpu_custom_call.1} parent=1 // pred_region
      _
    $region25: #{tpu_custom_call.1} parent=1 // pred_fallthru
      _
    // Predicated region
    $region26: #{tpu_custom_call.1} parent=1 // pred_check
      _
    $region27: #{tpu_custom_call.1} parent=1 // pred_check_branch
      %27 = sbr.rel (0) target = $region29
    $region28: #{tpu_custom_call.1} parent=1 // pred_region
      _
    $region29: #{tpu_custom_call.1} parent=1 // pred_fallthru
      _
    // Predicated region
    $region30: #{tpu_custom_call.1} parent=1 // pred_check
      _
    $region31: #{tpu_custom_call.1} parent=1 // pred_check_branch
      %29 = sbr.rel (0) target = $region33
    $region32: #{tpu_custom_call.1} parent=1 // pred_region
      _
    $region33: #{tpu_custom_call.1} parent=1 // pred_fallthru
      _
    %v31 = vld [vmem:[%s0] sm:$0xff]
    %v32 = vld [vmem:[%s0 + $0x8] sm:$0xff]
    %v33 = vld [vmem:[%s0 + $0x10] sm:$0xff]
    %v34 = vld [vmem:[%s0 + $0x18] sm:$0xff]
    %v35 = vpack.c.bf16 %v32, %v31
    %v36 = vpack.c.bf16 %v34, %v33
    %v37 = vld [vmem:[%s2] sm:$0xf]
    %v38 = vld [vmem:[%s2 + $0x4] sm:$0xf]
    %v39 = vld [vmem:[%s2 + $0x8] sm:$0xf]
    %v40 = vld [vmem:[%s2 + $0xc] sm:$0xf]
    %v41 = vld [vmem:[%s3] sm:$0xff]
    %v42 = vld [vmem:[%s3 + $0x8] sm:$0xff]
    %v43 = vld [vmem:[%s3 + $0x10] sm:$0xff]
    %v44 = vld [vmem:[%s3 + $0x18] sm:$0xff]
    %46 = vset.pattern.permute.xlu0 0
    %47 = vperm.xlu0 %46, %v41
    %v48 = vpop.permute.xlu0 %47
    %51 = vset.pattern.permute.xlu0 0
    %52 = vperm.xlu0 %51, %v42
    %v53 = vpop.permute.xlu0 %52
    %56 = vset.pattern.permute.xlu0 0
    %57 = vperm.xlu0 %56, %v43
    %v58 = vpop.permute.xlu0 %57
    %61 = vset.pattern.permute.xlu0 0
    %62 = vperm.xlu0 %61, %v44
    %v63 = vpop.permute.xlu0 %62
    %v69 = vunpack.c.l.b16 %v37
    %v70 = vunpack.c.l.b16 %v38
    %v71 = vunpack.c.l.b16 %v39
    %v72 = vunpack.c.l.b16 %v40
    %v73 = vpack.c.b16 %v70, %v69
    %v74 = vpack.c.b16 %v72, %v71
    %vm75 = vcmask 261120
    %v77 = vsel %vm75, %v73, 0
    %v80 = vsel %vm75, %v74, 0
    %82 = vmatprep.subr.bf16.mxu0 0
    %83 = vmatpush1.bf16.msra.mxu0 0
    %84 = vmatprep.subr.bf16.mxu0 0
    %85 = vmatpush1.bf16.msra.mxu0 0
    %86 = vmatprep.subr.bf16.mxu0 0
    %87 = vmatpush1.bf16.msra.mxu0 0
    %88 = vmatprep.subr.bf16.mxu0 0
    %89 = vmatpush1.bf16.msra.mxu0 0
    %90 = vmatprep.subr.bf16.mxu0 0
    %91 = vmatpush1.bf16.msra.mxu0 0
    %92 = vmatprep.subr.bf16.mxu0 0
    %93 = vmatpush1.bf16.msra.mxu0 0
    %94 = vmatprep.subr.bf16.mxu0 0
    %95 = vmatpush1.bf16.msra.mxu0 %v36
    %96 = vmatprep.subr.bf16.mxu0 0
    %97 = vmatpush1.bf16.msra.mxu0 %v35
    %98 = vmatprep.subr.bf16.mxu0 0
    %99 = vmatpush2.bf16.msra.mxu0 0
    %100 = vmatprep.subr.bf16.mxu0 0
    %101 = vmatpush2.bf16.msra.mxu0 0
    %102 = vmatprep.subr.bf16.mxu0 0
    %103 = vmatpush2.bf16.msra.mxu0 0
    %104 = vmatprep.subr.bf16.mxu0 0
    %105 = vmatpush2.bf16.msra.mxu0 0
    %106 = vmatprep.subr.bf16.mxu0 0
    %107 = vmatpush2.bf16.msra.mxu0 0
    %108 = vmatprep.subr.bf16.mxu0 0
    %109 = vmatpush2.bf16.msra.mxu0 0
    %110 = vmatprep.subr.bf16.mxu0 0
    %111 = vmatpush2.bf16.msra.mxu0 0
    %112 = vmatprep.subr.bf16.mxu0 0
    %113 = vmatpush2.bf16.msra.mxu0 0
    %114 = vmatprep.mubr.bf16.mxu0 0
    %115 = vmatmul.mubr.bf16.gmra.mxu0 %v77
    %v116 = vpop.f32.mrf.mxu0
    %v117 = vadd.f32 %v48, %v116
    %v118 = vpop.f32.mrf.mxu0
    %v119 = vpop.f32.mrf.mxu0
    %v120 = vadd.f32 %v53, %v119
    %v121 = vpop.f32.mrf.mxu0
    %122 = vmatprep.mubr.bf16.mxu0 0
    %123 = vmatmul.mubr.bf16.gmra.mxu0 %v80
    %v124 = vpop.f32.mrf.mxu0
    %v125 = vadd.f32 %v58, %v124
    %v126 = vpop.f32.mrf.mxu0
    %v127 = vpop.f32.mrf.mxu0
    %v128 = vadd.f32 %v63, %v127
    %v129 = vpop.f32.mrf.mxu0
    %130 = vdwg.mxu0
    %v131 = vadd.f32 %v117, %v120
    %v132 = vadd.f32 %v131, %v125
    %v133 = vadd.f32 %v132, %v128
    %v134 = vrot.slane %v133, 4
    %v135 = vadd.f32 %v133, %v134
    %v136 = vrot.slane %v135, 2
    %v137 = vadd.f32 %v135, %v136
    %v138 = vrot.slane %v137, 1
    %v139 = vadd.f32 %v137, %v138
    %v140 = vrcp.pop 32.0
    %v141 = vmul.f32 %v139, %v140
    %v142 = vsub.f32 %v117, %v141
    %v143 = vsub.f32 %v120, %v141
    %v144 = vsub.f32 %v125, %v141
    %v145 = vsub.f32 %v128, %v141
    %v146 = vmul.f32 %v142, %v142
    %v147 = vmul.f32 %v143, %v143
    %v148 = vmul.f32 %v144, %v144
    %v149 = vmul.f32 %v145, %v145
    %v150 = vadd.f32 %v146, %v147
    %v151 = vadd.f32 %v150, %v148
    %v152 = vadd.f32 %v151, %v149
    %v153 = vrot.slane %v152, 4
    %v154 = vadd.f32 %v152, %v153
    %v155 = vrot.slane %v154, 2
    %v156 = vadd.f32 %v154, %v155
    %v157 = vrot.slane %v156, 1
    %v158 = vadd.f32 %v156, %v157
    %v159 = vmul.f32 %v158, %v140
    %v160 = vadd.f32 %v159, 1e-05
    %v161 = vrsqrt.pop %v160
    %v162 = vmul.f32 %v142, %v161
    %v163 = vmul.f32 %v143, %v161
    %v164 = vmul.f32 %v144, %v161
    %v165 = vmul.f32 %v145, %v161
    %v166 = vmax.f32 %v162, 0.0
    %v167 = vmax.f32 %v163, 0.0
    %v168 = vmax.f32 %v164, 0.0
    %v169 = vmax.f32 %v165, 0.0
    %v170 = vld [vmem:[%s4] sm:$0xf]
    %v171 = vld [vmem:[%s4 + $0x4] sm:$0xf]
    %v172 = vld [vmem:[%s4 + $0x8] sm:$0xf]
    %v173 = vld [vmem:[%s4 + $0xc] sm:$0xf]
    %v174 = vpack.c.bf16 %v167, %v166
    %v175 = vpack.c.bf16 %v169, %v168
    %v176 = vld [vmem:[%s5] sm:$0xff]
    %v177 = vld [vmem:[%s5 + $0x8] sm:$0xff]
    %v178 = vld [vmem:[%s5 + $0x10] sm:$0xff]
    %v179 = vld [vmem:[%s5 + $0x18] sm:$0xff]
    %181 = vset.pattern.permute.xlu0 0
    %182 = vperm.xlu0 %181, %v176
    %v183 = vpop.permute.xlu0 %182
    %186 = vset.pattern.permute.xlu0 0
    %187 = vperm.xlu0 %186, %v177
    %v188 = vpop.permute.xlu0 %187
    %191 = vset.pattern.permute.xlu0 0
    %192 = vperm.xlu0 %191, %v178
    %v193 = vpop.permute.xlu0 %192
    %196 = vset.pattern.permute.xlu0 0
    %197 = vperm.xlu0 %196, %v179
    %v198 = vpop.permute.xlu0 %197
    %v204 = vunpack.c.l.b16 %v170
    %v205 = vunpack.c.l.b16 %v171
    %v206 = vunpack.c.l.b16 %v172
    %v207 = vunpack.c.l.b16 %v173
    %v208 = vpack.c.b16 %v205, %v204
    %v209 = vpack.c.b16 %v207, %v206
    %v211 = vsel %vm75, %v208, 0
    %v214 = vsel %vm75, %v209, 0
    %216 = vmatprep.subr.bf16.mxu0 0
    %217 = vmatpush1.bf16.msra.mxu0 0
    %218 = vmatprep.subr.bf16.mxu0 0
    %219 = vmatpush1.bf16.msra.mxu0 0
    %220 = vmatprep.subr.bf16.mxu0 0
    %221 = vmatpush1.bf16.msra.mxu0 0
    %222 = vmatprep.subr.bf16.mxu0 0
    %223 = vmatpush1.bf16.msra.mxu0 0
    %224 = vmatprep.subr.bf16.mxu0 0
    %225 = vmatpush1.bf16.msra.mxu0 0
    %226 = vmatprep.subr.bf16.mxu0 0
    %227 = vmatpush1.bf16.msra.mxu0 0
    %228 = vmatprep.subr.bf16.mxu0 0
    %229 = vmatpush1.bf16.msra.mxu0 %v175
    %230 = vmatprep.subr.bf16.mxu0 0
    %231 = vmatpush1.bf16.msra.mxu0 %v174
    %232 = vmatprep.subr.bf16.mxu0 0
    %233 = vmatpush2.bf16.msra.mxu0 0
    %234 = vmatprep.subr.bf16.mxu0 0
    %235 = vmatpush2.bf16.msra.mxu0 0
    %236 = vmatprep.subr.bf16.mxu0 0
    %237 = vmatpush2.bf16.msra.mxu0 0
    %238 = vmatprep.subr.bf16.mxu0 0
    %239 = vmatpush2.bf16.msra.mxu0 0
    %240 = vmatprep.subr.bf16.mxu0 0
    %241 = vmatpush2.bf16.msra.mxu0 0
    %242 = vmatprep.subr.bf16.mxu0 0
    %243 = vmatpush2.bf16.msra.mxu0 0
    %244 = vmatprep.subr.bf16.mxu0 0
    %245 = vmatpush2.bf16.msra.mxu0 0
    %246 = vmatprep.subr.bf16.mxu0 0
    %247 = vmatpush2.bf16.msra.mxu0 0
    %248 = vmatprep.mubr.bf16.mxu0 0
    %249 = vmatmul.mubr.bf16.gmra.mxu0 %v211
    %v250 = vpop.f32.mrf.mxu0
    %v251 = vadd.f32 %v183, %v250
    %v252 = vpop.f32.mrf.mxu0
    %v253 = vpop.f32.mrf.mxu0
    %v254 = vadd.f32 %v188, %v253
    %v255 = vpop.f32.mrf.mxu0
    %256 = vmatprep.mubr.bf16.mxu0 0
    %257 = vmatmul.mubr.bf16.gmra.mxu0 %v214
    %v258 = vpop.f32.mrf.mxu0
    %v259 = vadd.f32 %v193, %v258
    %v260 = vpop.f32.mrf.mxu0
    %v261 = vpop.f32.mrf.mxu0
    %v262 = vadd.f32 %v198, %v261
    %v263 = vpop.f32.mrf.mxu0
    %264 = vdwg.mxu0
    %v265 = vadd.f32 %v251, %v254
    %v266 = vadd.f32 %v265, %v259
    %v267 = vadd.f32 %v266, %v262
    %v268 = vrot.slane %v267, 4
    %v269 = vadd.f32 %v267, %v268
    %v270 = vrot.slane %v269, 2
    %v271 = vadd.f32 %v269, %v270
    %v272 = vrot.slane %v271, 1
    %v273 = vadd.f32 %v271, %v272
    %v274 = vmul.f32 %v273, %v140
    %v275 = vsub.f32 %v251, %v274
    %v276 = vsub.f32 %v254, %v274
    %v277 = vsub.f32 %v259, %v274
    %v278 = vsub.f32 %v262, %v274
    %v279 = vmul.f32 %v275, %v275
    %v280 = vmul.f32 %v276, %v276
    %v281 = vmul.f32 %v277, %v277
    %v282 = vmul.f32 %v278, %v278
    %v283 = vadd.f32 %v279, %v280
    %v284 = vadd.f32 %v283, %v281
    %v285 = vadd.f32 %v284, %v282
    %v286 = vrot.slane %v285, 4
    %v287 = vadd.f32 %v285, %v286
    %v288 = vrot.slane %v287, 2
    %v289 = vadd.f32 %v287, %v288
    %v290 = vrot.slane %v289, 1
    %v291 = vadd.f32 %v289, %v290
    %v292 = vmul.f32 %v291, %v140
    %v293 = vadd.f32 %v292, 1e-05
    %v294 = vrsqrt.pop %v293
    %v295 = vmul.f32 %v275, %v294
    %v296 = vmul.f32 %v276, %v294
    %v297 = vmul.f32 %v277, %v294
    %v298 = vmul.f32 %v278, %v294
    %v299 = vmax.f32 %v295, 0.0
    %v300 = vmax.f32 %v296, 0.0
    %v301 = vmax.f32 %v297, 0.0
    %v302 = vmax.f32 %v298, 0.0
    %v303 = vld [vmem:[%s6] sm:$0xf]
    %v304 = vld [vmem:[%s6 + $0x4] sm:$0xf]
    %v305 = vpack.c.bf16 %v300, %v299
    %v306 = vpack.c.bf16 %v302, %v301
    %v307 = vld [vmem:[%s7] sm:$0xff]
    %v308 = vld [vmem:[%s7 + $0x8] sm:$0xff]
    %310 = vset.pattern.permute.xlu0 0
    %311 = vperm.xlu0 %310, %v307
    %v312 = vpop.permute.xlu0 %311
    %315 = vset.pattern.permute.xlu0 0
    %316 = vperm.xlu0 %315, %v308
    %v317 = vpop.permute.xlu0 %316
    %v321 = vunpack.c.l.b16 %v303
    %v322 = vunpack.c.l.b16 %v304
    %v323 = vpack.c.b16 %v322, %v321
    %v325 = vsel %vm75, %v323, 0
    %327 = vmatprep.subr.bf16.mxu0 0
    %328 = vmatpush1.bf16.msra.mxu0 0
    %329 = vmatprep.subr.bf16.mxu0 0
    %330 = vmatpush1.bf16.msra.mxu0 0
    %331 = vmatprep.subr.bf16.mxu0 0
    %332 = vmatpush1.bf16.msra.mxu0 0
    %333 = vmatprep.subr.bf16.mxu0 0
    %334 = vmatpush1.bf16.msra.mxu0 0
    %335 = vmatprep.subr.bf16.mxu0 0
    %336 = vmatpush1.bf16.msra.mxu0 0
    %337 = vmatprep.subr.bf16.mxu0 0
    %338 = vmatpush1.bf16.msra.mxu0 0
    %339 = vmatprep.subr.bf16.mxu0 0
    %340 = vmatpush1.bf16.msra.mxu0 %v306
    %341 = vmatprep.subr.bf16.mxu0 0
    %342 = vmatpush1.bf16.msra.mxu0 %v305
    %343 = vmatprep.subr.bf16.mxu0 0
    %344 = vmatpush2.bf16.msra.mxu0 0
    %345 = vmatprep.subr.bf16.mxu0 0
    %346 = vmatpush2.bf16.msra.mxu0 0
    %347 = vmatprep.subr.bf16.mxu0 0
    %348 = vmatpush2.bf16.msra.mxu0 0
    %349 = vmatprep.subr.bf16.mxu0 0
    %350 = vmatpush2.bf16.msra.mxu0 0
    %351 = vmatprep.subr.bf16.mxu0 0
    %352 = vmatpush2.bf16.msra.mxu0 0
    %353 = vmatprep.subr.bf16.mxu0 0
    %354 = vmatpush2.bf16.msra.mxu0 0
    %355 = vmatprep.subr.bf16.mxu0 0
    %356 = vmatpush2.bf16.msra.mxu0 0
    %357 = vmatprep.subr.bf16.mxu0 0
    %358 = vmatpush2.bf16.msra.mxu0 0
    %359 = vmatprep.mubr.bf16.mxu0 0
    %360 = vmatmul.mubr.bf16.gmra.mxu0 %v325
    %v361 = vpop.f32.mrf.mxu0
    %v362 = vadd.f32 %v312, %v361
    %v363 = vpop.f32.mrf.mxu0
    %v364 = vpop.f32.mrf.mxu0
    %v365 = vadd.f32 %v317, %v364
    %v366 = vpop.f32.mrf.mxu0
    %367 = vdwg.mxu0
    %v368 = vld [vmem:[%s1] sm:$0xff]
    %v369 = vld [vmem:[%s1 + $0x8] sm:$0xff]
    %v370 = vadd.f32 %v368, 1e-20
    %v371 = vadd.f32 %v369, 1e-20
    %v372 = vlog2.pop %v370
    %v373 = vmul.f32 %v372, 0.6931472
    %v374 = vlog2.pop %v371
    %v375 = vmul.f32 %v374, 0.6931472
    %v376 = vsub.f32 0.0, %v373
    %v377 = vsub.f32 0.0, %v375
    %v378 = vadd.f32 %v376, 1e-20
    %v379 = vadd.f32 %v377, 1e-20
    %v380 = vlog2.pop %v378
    %v381 = vmul.f32 %v380, 0.6931472
    %v382 = vlog2.pop %v379
    %v383 = vmul.f32 %v382, 0.6931472
    %v384 = vsub.f32 0.0, %v381
    %v385 = vsub.f32 0.0, %v383
    %v386 = vadd.f32 %v362, %v384
    %v387 = vadd.f32 %v365, %v385
    %v388 = vmax.f32 %v386, %v387
    %v389 = vrot.slane %v388, 4
    %v390 = vmax.f32 %v388, %v389
    %v391 = vrot.slane %v390, 2
    %v392 = vmax.f32 %v390, %v391
    %v393 = vrot.slane %v392, 1
    %v394 = vmax.f32 %v392, %v393
    %v395 = vsub.f32 %v386, %v394
    %v396 = vsub.f32 %v387, %v394
    %v397 = vmul.f32 %v395, 1.442695
    %v398 = vpow.pop %v397
    %v399 = vmul.f32 %v396, 1.442695
    %v400 = vpow.pop %v399
    %v401 = vadd.f32 %v398, %v400
    %v402 = vrot.slane %v401, 4
    %v403 = vadd.f32 %v401, %v402
    %v404 = vrot.slane %v403, 2
    %v405 = vadd.f32 %v403, %v404
    %v406 = vrot.slane %v405, 1
    %v407 = vadd.f32 %v405, %v406
    %v408 = vrcp.pop %v407
    %v409 = vmul.f32 %v398, %v408
    %v410 = vmul.f32 %v400, %v408
    %411 = vst [vmem:[#allocation2] sm:$0xff] %v409
    %412 = vst [vmem:[#allocation2 + $0x8] sm:$0xff] %v410
    // Predicated region
    $region34: #{tpu_custom_call.1} parent=1 // pred_check
      _
    $region35: #{tpu_custom_call.1} parent=1 // pred_check_branch
      %414 = sbr.rel (0) target = $region37
    $region36: #{tpu_custom_call.1} parent=1 // pred_region
      %s416 = ssub.s32 256, 256
      %417 = vsyncadd [#allocation3], %s416
      %s418 = sshll.u32 [#allocation2], 4
      %s419 = int_to_ptr.vmem [resolvable:$true] %s418
      %424 = dma.vmem_to_hbm [thread:$0]  %s419, 256, %s8, [#allocation3], 128, 128, 8
    $region37: #{tpu_custom_call.1} parent=1 // pred_fallthru
      _
    // Predicated region
    $region38: #{tpu_custom_call.1} parent=1 // pred_check
      _
    $region39: #{tpu_custom_call.1} parent=1 // pred_check_branch
      %426 = sbr.rel (0) target = $region41
    $region40: #{tpu_custom_call.1} parent=1 // pred_region
      %427 = dma.done [#allocation3], 256
    $region41: #{tpu_custom_call.1} parent=1 // pred_fallthru
      _
    %428 = vsyncpa [#allocation3], 1

</llo_original>
